<compile_context>
chip_gen: v7x
topology: tpu7x:2x2x1
jax: 0.10.0
libtpu: 0.0.40
codegen_flags: <defaults>
</compile_context>

<pallas_src>
import functools

import jax
import jax.numpy as jnp
import numpy as np
from jax.experimental import pallas as pl
from jax.experimental.pallas import tpu as pltpu

_LANES = 128
_SUBLANES = 8


def _round_up(a, b):
    return (a + b - 1) // b * b


def _cdiv(a, b):
    return (a + b - 1) // b


def _tpu_defaults():
    """Generation-aware defaults (num_partials, VMEM budget / limit cap)."""
    kind = ""
    try:
        kind = jax.devices()[0].device_kind.lower()
    except Exception:
        pass
    vmem_phys = 128 << 20
    try:
        vmem_phys = int(getattr(pltpu.get_tpu_info(), "vmem_capacity_bytes",
                                vmem_phys))
    except Exception:
        pass
    two_tc = "v7" in kind
    small_vmem = two_tc or vmem_phys <= (64 << 20)
    if small_vmem:
        # v7x-class: 64 MiB VMEM per TensorCore, 2 TCs per chip.
        return dict(num_partials=2 if two_tc else 1,
                    vmem_budget_bytes=22 << 20,
                    vmem_limit_cap_bytes=min(vmem_phys, 48 << 20))
    # v5e / v6e: 128 MiB VMEM, single TensorCore.
    return dict(num_partials=1,
                vmem_budget_bytes=48 << 20,
                vmem_limit_cap_bytes=min(vmem_phys, 96 << 20))


def _focal_loss_kernel(t_ref, x_ref, out_ref, acc_ref, *,
                       gamma, eps, alpha, use_mxu_sums):
    i = pl.program_id(1)                       # reduction step over row chunks

    @pl.when(i == 0)
    def _():
        acc_ref[...] = jnp.zeros_like(acc_ref)

    t = t_ref[...]                             # (TM, 1) int32; -1 on padded rows
    valid = t >= 0                             # (TM, 1) bool
    x = x_ref[...].astype(jnp.float32)         # (TM, C), possibly bf16 input
    # Padded / out-of-bounds rows may contain arbitrary bits (even NaN); zero
    # them before any reduction so nothing toxic reaches the accumulator.
    x = jnp.where(valid, x, 0.0)
    tm, c = x.shape

    # Row-wise stable softmax pieces.
    m = jnp.max(x, axis=-1, keepdims=True)                       # XLU
    e = jnp.exp(x - m)                                           # EUP, per element
    cls = jax.lax.broadcasted_iota(jnp.int32, (tm, c), 1)
    e_sel = jnp.where(cls == t, e, 0.0)        # target-class term (no gather)

    if use_mxu_sums:
        # Lane sums on the otherwise-idle MXU (the XLU keeps only the max).
        ones = jnp.ones((c, _LANES), dtype=jnp.float32)
        s = jnp.dot(e, ones, preferred_element_type=jnp.float32,
                    precision=jax.lax.Precision.HIGHEST)[:, 0:1]
        e_t = jnp.dot(e_sel, ones, preferred_element_type=jnp.float32,
                      precision=jax.lax.Precision.HIGHEST)[:, 0:1]
    else:
        s = jnp.sum(e, axis=-1, keepdims=True)
        e_t = jnp.sum(e_sel, axis=-1, keepdims=True)

    # p_t = softmax(x)[target]; clipped exactly like the reference before log.
    p_t = jnp.clip(e_t / s, eps, 1.0 - eps)

    loss = -jnp.log(p_t)
    if gamma != 0.0:
        if float(gamma).is_integer() and 0 < gamma <= 4:
            # small integer gamma (e.g. gamma=2): VPU multiplies only
            w = 1.0 - p_t
            f = w
            for _ in range(int(gamma) - 1):
                f = f * w
            loss = loss * f
        else:
            loss = loss * jnp.power(1.0 - p_t, gamma)
    loss = alpha * loss

    acc_ref[...] = acc_ref[...] + jnp.where(valid, loss, 0.0)

    # Defer the cross-sublane reduce + store to the final reduction step.
    @pl.when(i == pl.num_programs(1) - 1)
    def _():
        out_ref[...] = jnp.broadcast_to(jnp.sum(acc_ref[...]), out_ref.shape)


def focal_loss(x, target, *, gamma=0.0, eps=1e-7, alpha=1.0,
               row_tile=None, num_partials=None, vmem_budget_bytes=None):
    """Pallas implementation of FocalLoss.forward(input, target) -> scalar.

    x may be f32 or bf16 (kernel upcasts).  Targets must be in [0, C);
    negative targets are treated as padding, targets >= C silently contribute
    the eps-clipped loss of a zero-probability class (same "no matching class"
    behavior as before, documented per review).
    """
    n, c = x.shape
    cfg = _tpu_defaults()
    if num_partials is None:
        num_partials = cfg["num_partials"]
    if vmem_budget_bytes is None:
        vmem_budget_bytes = cfg["vmem_budget_bytes"]

    itemsize = x.dtype.itemsize
    c_lanes = _round_up(max(c, 1), _LANES)     # lane-padded width inside VMEM
    # VMEM per row: double-buffered logits + lane-padded targets, the
    # accumulator column, and ~3 tiles worth of f32 elementwise temporaries
    # (exp result, iota/compare, masked array) in case Mosaic does not fuse.
    bytes_per_row = (2 * (c_lanes * itemsize + _LANES * 4)
                     + _LANES * 4
                     + 3 * c_lanes * 4)

    if row_tile is None:
        cap = max(_SUBLANES,
                  (vmem_budget_bytes // bytes_per_row) // _SUBLANES * _SUBLANES)
        row_tile = min(16384, cap, _round_up(n, _SUBLANES))
    row_tile = max(_SUBLANES, _round_up(row_tile, _SUBLANES))

    n_blocks = _cdiv(n, row_tile)              # row blocks containing real rows
    total_chunks = _round_up(n_blocks, num_partials)
    chunks_per_partial = total_chunks // num_partials
    n_pad_t = total_chunks * row_tile
    max_blk = n_blocks - 1

    # Only the tiny target vector gets padded; -1 marks padded rows so the
    # kernel masks them (the logits array is streamed unpadded).
    t_p = jnp.pad(target.astype(jnp.int32), (0, n_pad_t - n), constant_values=-1)
    t_p = t_p.reshape(n_pad_t, 1)

    use_mxu_sums = c_lanes <= 512

    kernel = functools.partial(_focal_loss_kernel, gamma=float(gamma),
                               eps=float(eps), alpha=float(alpha),
                               use_mxu_sums=use_mxu_sums)

    # VMEM estimate (inputs double-buffered + scratch + temporaries + outputs),
    # clamped to a generation-aware cap.
    est = (row_tile * bytes_per_row
           + num_partials * _SUBLANES * _LANES * 4 * 2
           + (1 << 20))
    vmem_limit = int(min(cfg["vmem_limit_cap_bytes"], max(32 << 20, 2 * est)))

    def t_map(p, i):
        return (p * chunks_per_partial + i, 0)

    if total_chunks == n_blocks:
        def x_map(p, i):
            return (p * chunks_per_partial + i, 0)
    else:
        # Grid steps past the last real row block re-read the last valid block
        # (never DMA out of bounds); their targets are -1 so they are masked.
        def x_map(p, i):
            return (jnp.minimum(p * chunks_per_partial + i, max_blk), 0)

    out = pl.pallas_call(
        kernel,
        out_shape=jax.ShapeDtypeStruct((num_partials, _SUBLANES, _LANES),
                                       jnp.float32),
        grid_spec=pltpu.PrefetchScalarGridSpec(
            num_scalar_prefetch=0,
            grid=(num_partials, chunks_per_partial),
            in_specs=[
                pl.BlockSpec((row_tile, 1), t_map),
                pl.BlockSpec((row_tile, c), x_map),   # last dim == full C
            ],
            # Per-partial output block, resident across the reduction axis.
            out_specs=pl.BlockSpec((1, _SUBLANES, _LANES),
                                   lambda p, i: (p, 0, 0)),
            scratch_shapes=[pltpu.VMEM((row_tile, 1), jnp.float32)],
        ),
        compiler_params=pltpu.CompilerParams(
            dimension_semantics=("parallel", "arbitrary"),
            vmem_limit_bytes=vmem_limit,
        ),
    )(t_p, x)
    # Each partial's total is broadcast across its (8,128) block; pick one lane.
    return jnp.sum(out[:, 0, 0])


def _focal_loss_ref(x, target, *, gamma=0.0, eps=1e-7, alpha=1.0):
    """Plain-JAX reference mirroring the PyTorch module."""
    c = x.shape[-1]
    y = jax.nn.one_hot(target, c, dtype=jnp.float32)
    p = jax.nn.softmax(x.astype(jnp.float32), axis=-1)
    p = jnp.clip(p, eps, 1.0 - eps)
    loss = -1.0 * y * jnp.log(p)
    loss = alpha * loss * (1.0 - p) ** gamma
    return jnp.sum(loss)


if __name__ == "__main__":
    key = jax.random.PRNGKey(0)
    k1, k2, k3, k4 = jax.random.split(key, 4)

    ok = True

    # Deliberately not multiples of 8 / 128: exercises lane & row masking.
    N, C = 22, 32
    x = jax.random.normal(k1, (N, C), dtype=jnp.float32)
    target = jax.random.randint(k2, (N,), 0, C, dtype=jnp.int32)
    # default config, the common focal config (integer gamma), non-integer gamma
    for gamma, alpha in ((0.0, 1.0), (2.0, 0.25), (1.5, 0.5)):
        got = jax.block_until_ready(focal_loss(x, target, gamma=gamma, alpha=alpha))
        want = _focal_loss_ref(x, target, gamma=gamma, alpha=alpha)
        ok &= bool(np.allclose(np.asarray(got), np.asarray(want),
                               rtol=1e-5, atol=1e-5))

    # Multi-chunk / clamped out-of-bounds block / padded-row path (tiny tile,
    # two partials, row count not a multiple of the tile).
    N2, C2 = 43, 40
    x2 = jax.random.normal(k3, (N2, C2), dtype=jnp.float32)
    t2 = jax.random.randint(k4, (N2,), 0, C2, dtype=jnp.int32)
    got2 = jax.block_until_ready(
        focal_loss(x2, t2, gamma=2.0, alpha=0.25, row_tile=16, num_partials=2))
    want2 = _focal_loss_ref(x2, t2, gamma=2.0, alpha=0.25)
    ok &= bool(np.allclose(np.asarray(got2), np.asarray(want2),
                           rtol=1e-5, atol=1e-5))

    print("KERNEL_OK" if ok else "KERNEL_MISMATCH")
</pallas_src>

<mosaic_0001>
module attributes {stable_mosaic.version = 11 : i64} {
  func.func @_focal_loss_kernel(%arg0: i32, %arg1: i32, %arg2: memref<24x1xi32, #tpu.memory_space<vmem>>, %arg3: memref<24x32xf32, #tpu.memory_space<vmem>>, %arg4: memref<1x8x128xf32, #tpu.memory_space<vmem>>, %arg5: memref<24x1xf32, #tpu.memory_space<vmem>>) attributes {dimension_semantics = [#tpu.dimension_semantics<parallel>, #tpu.dimension_semantics<arbitrary>], iteration_bounds = array<i64: 1, 1>, scalar_prefetch = 0 : i64, scratch_operands = 1 : i64, tpu.core_type = #tpu.core_type<tc>, window_params = [{transform_indices = @transform_0, window_bounds = array<i64: 24, 1>}, {transform_indices = @transform_1, window_bounds = array<i64: 24, 32>}, {transform_indices = @transform_2, window_bounds = array<i64: 1, 8, 128>}]} {
    %c0_i32 = arith.constant 0 : i32
    %0 = arith.cmpi eq, %arg1, %c0_i32 : i32
    %1 = arith.extui %0 : i1 to i32
    %c0_i32_0 = arith.constant 0 : i32
    %2 = arith.cmpi ne, %1, %c0_i32_0 : i32
    scf.if %2 {
      %cst_21 = arith.constant 0.000000e+00 : f32
      %44 = vector.broadcast %cst_21 : f32 to vector<24x1xf32>
      %c0_22 = arith.constant 0 : index
      %c0_23 = arith.constant 0 : index
      %45 = vector.load %arg5[%c0_22, %c0_23] : memref<24x1xf32, #tpu.memory_space<vmem>>, vector<24x1xf32>
      tpu.vector_store %arg5[%c0_22, %c0_23], %44 {strides = array<i32>} : memref<24x1xf32, #tpu.memory_space<vmem>>, vector<24x1xf32>,
    } else {
    }
    %c0 = arith.constant 0 : index
    %c0_1 = arith.constant 0 : index
    %3 = vector.load %arg2[%c0, %c0_1] : memref<24x1xi32, #tpu.memory_space<vmem>>, vector<24x1xi32>
    %c0_i32_2 = arith.constant 0 : i32
    %4 = vector.broadcast %c0_i32_2 : i32 to vector<24x1xi32>
    %5 = arith.cmpi sge, %3, %4 : vector<24x1xi32>
    %c0_3 = arith.constant 0 : index
    %c0_4 = arith.constant 0 : index
    %6 = vector.load %arg3[%c0_3, %c0_4] : memref<24x32xf32, #tpu.memory_space<vmem>>, vector<24x32xf32>
    %cst = arith.constant 0.000000e+00 : f32
    %7 = vector.shape_cast %5 : vector<24x1xi1> to vector<24x1xi1>
    %8 = vector.broadcast %7 : vector<24x1xi1> to vector<24x32xi1>
    %9 = vector.broadcast %cst : f32 to vector<24x32xf32>
    %10 = arith.select %8, %6, %9 : vector<24x32xi1>, vector<24x32xf32>
    %cst_5 = arith.constant dense<0xFF800000> : vector<24xf32>
    %11 = vector.multi_reduction <maximumf>, %10, %cst_5 [1] : vector<24x32xf32> to vector<24xf32>
    %12 = vector.shape_cast %11 : vector<24xf32> to vector<24x1xf32>
    %13 = vector.broadcast %12 : vector<24x1xf32> to vector<24x32xf32>
    %14 = arith.subf %10, %13 : vector<24x32xf32>
    %15 = math.exp %14 : vector<24x32xf32>
    %16 = tpu.iota {dimensions = array<i32: 1>} : vector<24x32xi32>
    %17 = vector.broadcast %3 : vector<24x1xi32> to vector<24x32xi32>
    %18 = arith.cmpi eq, %16, %17 : vector<24x32xi32>
    %cst_6 = arith.constant 0.000000e+00 : f32
    %19 = vector.broadcast %cst_6 : f32 to vector<24x32xf32>
    %20 = arith.select %18, %15, %19 : vector<24x32xi1>, vector<24x32xf32>
    %cst_7 = arith.constant 1.000000e+00 : f32
    %21 = vector.broadcast %cst_7 : f32 to vector<32x128xf32>
    %cst_8 = arith.constant dense<0.000000e+00> : vector<24x128xf32>
    %22 = tpu.matmul %15, %21, %cst_8 {dimension_numbers = #tpu.dot_dimension_numbers<[1], [0], [0], [1], [0, 0, 1, 1], [], []>, precision = #tpu.contract_precision<fp32>} : vector<24x32xf32>, vector<32x128xf32>, vector<24x128xf32> -> vector<24x128xf32>
    %23 = vector.extract_strided_slice %22 {offsets = [0, 0], sizes = [24, 1], strides = [1, 1]} : vector<24x128xf32> to vector<24x1xf32>
    %cst_9 = arith.constant dense<0.000000e+00> : vector<24x128xf32>
    %24 = tpu.matmul %20, %21, %cst_9 {dimension_numbers = #tpu.dot_dimension_numbers<[1], [0], [0], [1], [0, 0, 1, 1], [], []>, precision = #tpu.contract_precision<fp32>} : vector<24x32xf32>, vector<32x128xf32>, vector<24x128xf32> -> vector<24x128xf32>
    %25 = vector.extract_strided_slice %24 {offsets = [0, 0], sizes = [24, 1], strides = [1, 1]} : vector<24x128xf32> to vector<24x1xf32>
    %26 = arith.divf %25, %23 : vector<24x1xf32>
    %cst_10 = arith.constant 1.000000e-07 : f32
    %cst_11 = arith.constant 0.99999988 : f32
    %27 = vector.broadcast %cst_10 : f32 to vector<24x1xf32>
    %28 = arith.maximumf %27, %26 : vector<24x1xf32>
    %29 = vector.broadcast %cst_11 : f32 to vector<24x1xf32>
    %30 = arith.minimumf %29, %28 : vector<24x1xf32>
    %31 = math.log %30 : vector<24x1xf32>
    %cst_12 = arith.constant 0.000000e+00 : f32
    %32 = vector.broadcast %cst_12 : f32 to vector<24x1xf32>
    %33 = arith.subf %32, %31 : vector<24x1xf32>
    %cst_13 = arith.constant 1.000000e+00 : f32
    %34 = vector.broadcast %cst_13 : f32 to vector<24x1xf32>
    %35 = arith.mulf %34, %33 : vector<24x1xf32>
    %c0_14 = arith.constant 0 : index
    %c0_15 = arith.constant 0 : index
    %36 = vector.load %arg5[%c0_14, %c0_15] : memref<24x1xf32, #tpu.memory_space<vmem>>, vector<24x1xf32>
    %cst_16 = arith.constant 0.000000e+00 : f32
    %37 = vector.broadcast %cst_16 : f32 to vector<24x1xf32>
    %38 = arith.select %5, %35, %37 : vector<24x1xi1>, vector<24x1xf32>
    %39 = arith.addf %36, %38 : vector<24x1xf32>
    %c0_17 = arith.constant 0 : index
    %c0_18 = arith.constant 0 : index
    %40 = vector.load %arg5[%c0_17, %c0_18] : memref<24x1xf32, #tpu.memory_space<vmem>>, vector<24x1xf32>
    tpu.vector_store %arg5[%c0_17, %c0_18], %39 {strides = array<i32>} : memref<24x1xf32, #tpu.memory_space<vmem>>, vector<24x1xf32>,
    %c0_i32_19 = arith.constant 0 : i32
    %41 = arith.cmpi eq, %arg1, %c0_i32_19 : i32
    %42 = arith.extui %41 : i1 to i32
    %c0_i32_20 = arith.constant 0 : i32
    %43 = arith.cmpi ne, %42, %c0_i32_20 : i32
    scf.if %43 {
      %c0_21 = arith.constant 0 : index
      %c0_22 = arith.constant 0 : index
      %44 = vector.load %arg5[%c0_21, %c0_22] : memref<24x1xf32, #tpu.memory_space<vmem>>, vector<24x1xf32>
      %45 = vector.shape_cast %44 : vector<24x1xf32> to vector<1x24x1xf32>
      %cst_23 = arith.constant dense<0.000000e+00> : vector<1xf32>
      %46 = vector.multi_reduction <add>, %45, %cst_23 [1, 2] : vector<1x24x1xf32> to vector<1xf32>
      %47 = vector.shape_cast %46 : vector<1xf32> to vector<1x1x1xf32>
      %48 = vector.extract %47[0, 0, 0] : f32 from vector<1x1x1xf32>
      %49 = vector.broadcast %48 : f32 to vector<1x8x128xf32>
      %c0_24 = arith.constant 0 : index
      %c0_25 = arith.constant 0 : index
      %c0_26 = arith.constant 0 : index
      %50 = vector.load %arg4[%c0_24, %c0_25, %c0_26] : memref<1x8x128xf32, #tpu.memory_space<vmem>>, vector<1x8x128xf32>
      tpu.vector_store %arg4[%c0_24, %c0_25, %c0_26], %49 {strides = array<i32>} : memref<1x8x128xf32, #tpu.memory_space<vmem>>, vector<1x8x128xf32>,
    } else {
    }
    return
  }
  func.func @transform_0(%arg0: i32, %arg1: i32) -> (i32, i32) {
    %c1_i32 = arith.constant 1 : i32
    %0 = arith.muli %arg0, %c1_i32 : i32
    %1 = arith.addi %0, %arg1 : i32
    %c0_i32 = arith.constant 0 : i32
    %c0_i32_0 = arith.constant 0 : i32
    return %1, %c0_i32 : i32, i32
  }
  func.func @transform_1(%arg0: i32, %arg1: i32) -> (i32, i32) {
    %c1_i32 = arith.constant 1 : i32
    %0 = arith.muli %arg0, %c1_i32 : i32
    %1 = arith.addi %0, %arg1 : i32
    %c0_i32 = arith.constant 0 : i32
    %c0_i32_0 = arith.constant 0 : i32
    return %1, %c0_i32 : i32, i32
  }
  func.func @transform_2(%arg0: i32, %arg1: i32) -> (i32, i32, i32) {
    %c0_i32 = arith.constant 0 : i32
    %c0_i32_0 = arith.constant 0 : i32
    %c0_i32_1 = arith.constant 0 : i32
    return %arg0, %c0_i32, %c0_i32_0 : i32, i32, i32
  }
}

</mosaic_0001>

<llo_original>
// kernel: tpu_custom_call.1
$region0: #{tpu_custom_call.1}
  #allocation0 [shape = 'u32[]', space=smem, size = 0x4, offset = 0x4, fixed_abs, tag = 'smem constant byte address 0x4 - core index']
  #allocation1 [shape = 'u32[144,128]{1,0:T(1,128)}', space=vmem, size = 0x12000, scoped, tag = 'internal scratch']
  #allocation2 [shape = 'f32[24,1]{1,0:T(8,128)}', space=vmem, size = 0x3000, scoped, tag = 'scratch operand']
  %s0 = inlined_call_operand.vmem [shape: s32[24,1], index: 0, kind: input, shape index: {}]
  %s1 = inlined_call_operand.vmem [shape: f32[22,32], index: 1, kind: input, shape index: {}]
  %s2 = inlined_call_operand.hbm [shape: f32[1,8,128], index: 2, kind: output, shape index: {}]
  %s3 = sld [smem:[#allocation0]]
  $region26: #{tpu_custom_call.1} parent=0
    _
  %s5 = ssub.s32 1, %s3
  %s6 = scalar_select 0, %s5, %s3
  $region1: #{tpu_custom_call.1} parent=0
    #allocation3 [shape = 'u8[4096]{0}', space=vmem, size = 0x1000, scoped, tag = 'output window, operand 0, single buffered']
    #allocation4 [shape = 's32[1]{0}', space=sflag, size = 0x4, scoped, tag = 'scoped memory for tpu_custom_call.1']
    %7 = vsyncpa [#allocation4], 0
    // Predicated region
    $region2: #{tpu_custom_call.1} parent=1 // pred_check
      _
    $region3: #{tpu_custom_call.1} parent=1 // pred_check_branch
      %9 = sbr.rel (0) target = $region5
    $region4: #{tpu_custom_call.1} parent=1 // pred_region
      %s10 = sadd.s32 0, 0
      %s11 = smul.u32 3, %s10
      %p12 = scmp.lt.s32.totalorder %s11, 2
      %s13 = scalar_select %p12, %s11, 2
      %s14 = smul.addr %s13, 8
      %s15 = scalar_lea.vmem %s0, %s14
      %s16 = sadd.s32 0, 0
      %s17 = smul.u32 3, %s16
    $region5: #{tpu_custom_call.1} parent=1 // pred_fallthru
      _
    // Predicated region
    $region6: #{tpu_custom_call.1} parent=1 // pred_check
      _
    $region7: #{tpu_custom_call.1} parent=1 // pred_check_branch
      %19 = sbr.rel (0) target = $region9
    $region8: #{tpu_custom_call.1} parent=1 // pred_region
      %s20 = sadd.s32 0, 0
      %s21 = smul.u32 3, %s20
      %p22 = scmp.lt.s32.totalorder %s21, 2
      %s23 = scalar_select %p22, %s21, 2
      %s24 = smul.addr %s23, 8
      %s25 = scalar_lea.vmem %s1, %s24
      %s26 = sadd.s32 0, 0
      %s27 = smul.u32 3, %s26
    $region9: #{tpu_custom_call.1} parent=1 // pred_fallthru
      _
    %s28 = sadd.s32 0, 0
    %s29 = smul.u32 3, %s28
    %p30 = scmp.lt.s32.totalorder %s29, 2
    %s31 = scalar_select %p30, %s29, 2
    %s32 = smul.addr %s31, 8
    %s33 = scalar_lea.vmem %s0, %s32
    %s34 = sadd.s32 0, 0
    %s35 = smul.u32 3, %s34
    %p36 = scmp.lt.s32.totalorder %s35, 2
    %s37 = scalar_select %p36, %s35, 2
    %s38 = smul.addr %s37, 8
    %s39 = scalar_lea.vmem %s1, %s38
    %s40 = sadd.s32 0, 0
    %s41 = smul.u32 3, %s40
    %p42 = scmp.lt.s32.totalorder %s41, 2
    %s43 = scalar_select %p42, %s41, 2
    %s44 = smul.addr %s43, 8
    %s45 = scalar_lea.vmem %s0, %s44
    %s46 = sadd.s32 0, 0
    %s47 = smul.u32 3, %s46
    %s48 = sadd.s32 0, 0
    %s49 = smul.u32 3, %s48
    %p50 = scmp.lt.s32.totalorder %s49, 2
    %s51 = scalar_select %p50, %s49, 2
    %s52 = smul.addr %s51, 8
    %s53 = scalar_lea.vmem %s1, %s52
    %s54 = sadd.s32 0, 0
    %s55 = smul.u32 3, %s54
    %p56 = scmp.eq.s32.totalorder 0, 0
    // Predicated region
    $region10: #{tpu_custom_call.1} parent=1 // pred_check
      %p57 = pneg %p56
    $region11: #{tpu_custom_call.1} parent=1 // pred_check_branch
      %59 = sbr.rel (%p57) target = $region13
    $region12: #{tpu_custom_call.1} parent=1 // pred_region
      %vm60 = vcmask 7168
      %61 = vst.msk [vmem:[#allocation2] sm:$0xff] %vm60, 0.0
      %62 = vst.msk [vmem:[#allocation2 + $0x8] sm:$0xff] %vm60, 0.0
      %63 = vst.msk [vmem:[#allocation2 + $0x10] sm:$0xff] %vm60, 0.0
    $region13: #{tpu_custom_call.1} parent=1 // pred_fallthru
      _
    %v64 = vld [vmem:[%s45] sm:$0xff]
    %v65 = vld [vmem:[%s45 + $0x8] sm:$0xff]
    %v66 = vld [vmem:[%s45 + $0x10] sm:$0xff]
    %vm67 = vcmp.ge.s32.totalorder %v64, 0
    %vm68 = vcmp.ge.s32.totalorder %v65, 0
    %vm69 = vcmp.ge.s32.totalorder %v66, 0
    %v70 = vld [vmem:[%s53] sm:$0xff]
    %v71 = vld [vmem:[%s53 + $0x8] sm:$0xff]
    %v72 = vld [vmem:[%s53 + $0x10] sm:$0xff]
    %v73 = vsel %vm67, 1, 0
    %v74 = vsel %vm68, 1, 0
    %v75 = vsel %vm69, 1, 0
    %76 = vset.pattern.permute.xlu0 0
    %77 = vperm.xlu0 %76, %v73
    %v78 = vpop.permute.xlu0 %77
    %79 = vset.pattern.permute.xlu0 0
    %80 = vperm.xlu0 %79, %v74
    %v81 = vpop.permute.xlu0 %80
    %82 = vset.pattern.permute.xlu0 0
    %83 = vperm.xlu0 %82, %v75
    %v84 = vpop.permute.xlu0 %83
    %vm85 = vcmp.eq.s32.totalorder %v78, 1
    %vm86 = vcmp.eq.s32.totalorder %v81, 1
    %vm87 = vcmp.eq.s32.totalorder %v84, 1
    %v88 = vsel %vm85, %v70, 0.0
    %v89 = vsel %vm86, %v71, 0.0
    %v90 = vsel %vm87, %v72, 0.0
    %vm91 = vcmask 261120
    %v92 = vsel %vm91, %v88, -inf
    %93 = vmax.xlane.f32.xlu0 %v92
    %v94 = vpop.xlane.xlu0 %93
    %v95 = vsel %vm91, %v89, -inf
    %96 = vmax.xlane.f32.xlu0 %v95
    %v97 = vpop.xlane.xlu0 %96
    %v98 = vsel %vm91, %v90, -inf
    %99 = vmax.xlane.f32.xlu0 %v98
    %v100 = vpop.xlane.xlu0 %99
    %v101 = vsub.f32 %v88, %v94
    %v102 = vsub.f32 %v89, %v97
    %v103 = vsub.f32 %v90, %v100
    %v104 = vmul.f32 %v101, 1.442695
    %v105 = vpow.pop %v104
    %v106 = vmul.f32 %v102, 1.442695
    %v107 = vpow.pop %v106
    %v108 = vmul.f32 %v103, 1.442695
    %v109 = vpow.pop %v108
    %v110 = vlaneseq
    %v111 = vand.u32 %v110, 127
    %112 = vset.pattern.permute.xlu0 0
    %113 = vperm.xlu0 %112, %v64
    %v114 = vpop.permute.xlu0 %113
    %115 = vset.pattern.permute.xlu0 0
    %116 = vperm.xlu0 %115, %v65
    %v117 = vpop.permute.xlu0 %116
    %118 = vset.pattern.permute.xlu0 0
    %119 = vperm.xlu0 %118, %v66
    %v120 = vpop.permute.xlu0 %119
    %vm121 = vcmp.eq.s32.totalorder %v111, %v114
    %vm122 = vcmp.eq.s32.totalorder %v111, %v117
    %vm123 = vcmp.eq.s32.totalorder %v111, %v120
    %v124 = vsel %vm121, %v105, 0.0
    %v125 = vsel %vm122, %v107, 0.0
    %v126 = vsel %vm123, %v109, 0.0
    %v128 = vsel %vm91, %v105, 0
    %v131 = vsel %vm91, %v107, 0
    %v134 = vsel %vm91, %v109, 0
    %136 = vmatprep.subr.mxu0 0.0
    %137 = vmatpush1.msra.mxu0 1.0
    %138 = vmatprep.subr.mxu0 0.0
    %139 = vmatpush1.msra.mxu0 1.0
    %140 = vmatprep.subr.mxu0 0.0
    %141 = vmatpush1.msra.mxu0 1.0
    %142 = vmatprep.subr.mxu0 0.0
    %143 = vmatpush1.msra.mxu0 1.0
    %144 = vmatprep.subr.mxu0 0.0
    %145 = vmatpush1.msra.mxu0 0.0
    %146 = vmatprep.subr.mxu0 0.0
    %147 = vmatpush1.msra.mxu0 0.0
    %148 = vmatprep.subr.mxu0 0.0
    %149 = vmatpush1.msra.mxu0 0.0
    %150 = vmatprep.subr.mxu0 0.0
    %151 = vmatpush1.msra.mxu0 0.0
    %152 = vmatprep.subr.mxu0 0.0
    %153 = vmatpush1.msra.mxu0 0.0
    %154 = vmatprep.subr.mxu0 0.0
    %155 = vmatpush1.msra.mxu0 0.0
    %156 = vmatprep.subr.mxu0 0.0
    %157 = vmatpush1.msra.mxu0 0.0
    %158 = vmatprep.subr.mxu0 0.0
    %159 = vmatpush1.msra.mxu0 0.0
    %160 = vmatprep.subr.mxu0 0.0
    %161 = vmatpush1.msra.mxu0 0.0
    %162 = vmatprep.subr.mxu0 0.0
    %163 = vmatpush1.msra.mxu0 0.0
    %164 = vmatprep.subr.mxu0 0.0
    %165 = vmatpush1.msra.mxu0 0.0
    %166 = vmatprep.subr.mxu0 0.0
    %167 = vmatpush1.msra.mxu0 0.0
    %168 = vmatprep.subr.mxu0 0.0
    %169 = vmatpush1.msra.mxu0 0.0
    %170 = vmatprep.subr.mxu0 0.0
    %171 = vmatpush1.msra.mxu0 0.0
    %172 = vmatprep.subr.mxu0 0.0
    %173 = vmatpush1.msra.mxu0 0.0
    %174 = vmatprep.subr.mxu0 0.0
    %175 = vmatpush1.msra.mxu0 0.0
    %176 = vmatprep.subr.mxu0 0.0
    %177 = vmatpush1.msra.mxu0 0.0
    %178 = vmatprep.subr.mxu0 0.0
    %179 = vmatpush1.msra.mxu0 0.0
    %180 = vmatprep.subr.mxu0 0.0
    %181 = vmatpush1.msra.mxu0 0.0
    %182 = vmatprep.subr.mxu0 0.0
    %183 = vmatpush1.msra.mxu0 0.0
    %184 = vmatprep.subr.mxu0 0.0
    %185 = vmatpush1.msra.mxu0 0.0
    %186 = vmatprep.subr.mxu0 0.0
    %187 = vmatpush1.msra.mxu0 0.0
    %188 = vmatprep.subr.mxu0 0.0
    %189 = vmatpush1.msra.mxu0 0.0
    %190 = vmatprep.subr.mxu0 0.0
    %191 = vmatpush1.msra.mxu0 0.0
    %192 = vmatprep.subr.mxu0 0.0
    %193 = vmatpush1.msra.mxu0 0.0
    %194 = vmatprep.subr.mxu0 0.0
    %195 = vmatpush1.msra.mxu0 0.0
    %196 = vmatprep.subr.mxu0 0.0
    %197 = vmatpush1.msra.mxu0 0.0
    %198 = vmatprep.subr.mxu0 0.0
    %199 = vmatpush1.msra.mxu0 0.0
    %200 = vmatprep.mubr.f32.mxu0 0.0
    %v201 = vand.u32 %v128, 4294901760
    %v202 = vsub.f32 %v128, %v201
    %v203 = vand.u32 %v202, 4294901760
    %v204 = vsub.f32 %v202, %v203
    %v205 = vand.u32 %v204, 4294901760
    %206 = vmatmul.mubr.f32.gmra.mrb[0].mxu0 %v205
    %v207 = vpop.f32.mrb[0].mxu0
    %v208 = vadd.f32 0.0, %v207
    %v209 = vpop.f32.mrb[0].mxu0
    %210 = vmatprep.mubr.f32.mxu0 0.0
    %v211 = vand.u32 %v131, 4294901760
    %v212 = vsub.f32 %v131, %v211
    %v213 = vand.u32 %v212, 4294901760
    %v214 = vsub.f32 %v212, %v213
    %v215 = vand.u32 %v214, 4294901760
    %216 = vmatmul.mubr.f32.gmra.mrb[0].mxu0 %v215
    %v217 = vpop.f32.mrb[0].mxu0
    %v218 = vadd.f32 0.0, %v217
    %v219 = vpop.f32.mrb[0].mxu0
    %220 = vmatprep.mubr.f32.mxu0 0.0
    %v221 = vand.u32 %v134, 4294901760
    %v222 = vsub.f32 %v134, %v221
    %v223 = vand.u32 %v222, 4294901760
    %v224 = vsub.f32 %v222, %v223
    %v225 = vand.u32 %v224, 4294901760
    %226 = vmatmul.mubr.f32.gmra.mrb[0].mxu0 %v225
    %v227 = vpop.f32.mrb[0].mxu0
    %v228 = vadd.f32 0.0, %v227
    %v229 = vpop.f32.mrb[0].mxu0
    %230 = vdwg.mxu0
    %231 = vmatprep.subr.mxu0 0.0
    %232 = vmatpush1.msra.mxu0 0.0
    %233 = vmatprep.subr.mxu0 0.0
    %234 = vmatpush1.msra.mxu0 0.0
    %235 = vmatprep.subr.mxu0 0.0
    %236 = vmatpush1.msra.mxu0 0.0
    %237 = vmatprep.subr.mxu0 0.0
    %238 = vmatpush1.msra.mxu0 0.0
    %239 = vmatprep.subr.mxu0 0.0
    %240 = vmatpush1.msra.mxu0 0.0
    %241 = vmatprep.subr.mxu0 0.0
    %242 = vmatpush1.msra.mxu0 0.0
    %243 = vmatprep.subr.mxu0 0.0
    %244 = vmatpush1.msra.mxu0 0.0
    %245 = vmatprep.subr.mxu0 0.0
    %246 = vmatpush1.msra.mxu0 0.0
    %247 = vmatprep.subr.mxu0 0.0
    %248 = vmatpush1.msra.mxu0 0.0
    %249 = vmatprep.subr.mxu0 0.0
    %250 = vmatpush1.msra.mxu0 0.0
    %251 = vmatprep.subr.mxu0 0.0
    %252 = vmatpush1.msra.mxu0 0.0
    %253 = vmatprep.subr.mxu0 0.0
    %254 = vmatpush1.msra.mxu0 0.0
    %255 = vmatprep.subr.mxu0 0.0
    %256 = vmatpush1.msra.mxu0 0.0
    %257 = vmatprep.subr.mxu0 0.0
    %258 = vmatpush1.msra.mxu0 0.0
    %259 = vmatprep.subr.mxu0 0.0
    %260 = vmatpush1.msra.mxu0 0.0
    %261 = vmatprep.subr.mxu0 0.0
    %262 = vmatpush1.msra.mxu0 0.0
    %263 = vmatprep.subr.mxu0 0.0
    %264 = vmatpush1.msra.mxu0 0.0
    %265 = vmatprep.subr.mxu0 0.0
    %266 = vmatpush1.msra.mxu0 0.0
    %267 = vmatprep.subr.mxu0 0.0
    %268 = vmatpush1.msra.mxu0 0.0
    %269 = vmatprep.subr.mxu0 0.0
    %270 = vmatpush1.msra.mxu0 0.0
    %271 = vmatprep.subr.mxu0 0.0
    %272 = vmatpush1.msra.mxu0 0.0
    %273 = vmatprep.subr.mxu0 0.0
    %274 = vmatpush1.msra.mxu0 0.0
    %275 = vmatprep.subr.mxu0 0.0
    %276 = vmatpush1.msra.mxu0 0.0
    %277 = vmatprep.subr.mxu0 0.0
    %278 = vmatpush1.msra.mxu0 0.0
    %279 = vmatprep.subr.mxu0 0.0
    %280 = vmatpush1.msra.mxu0 0.0
    %281 = vmatprep.subr.mxu0 0.0
    %282 = vmatpush1.msra.mxu0 0.0
    %283 = vmatprep.subr.mxu0 0.0
    %284 = vmatpush1.msra.mxu0 0.0
    %285 = vmatprep.subr.mxu0 0.0
    %286 = vmatpush1.msra.mxu0 0.0
    %287 = vmatprep.subr.mxu0 0.0
    %288 = vmatpush1.msra.mxu0 0.0
    %289 = vmatprep.subr.mxu0 0.0
    %290 = vmatpush1.msra.mxu0 0.0
    %291 = vmatprep.subr.mxu0 0.0
    %292 = vmatpush1.msra.mxu0 0.0
    %293 = vmatprep.subr.mxu0 0.0
    %294 = vmatpush1.msra.mxu0 0.0
    %295 = vmatprep.mubr.f32.mxu0 0.0
    %v296 = vand.u32 %v128, 4294901760
    %297 = vmatmul.mubr.f32.gmra.mrb[0].mxu0 %v296
    %v298 = vpop.f32.mrb[0].mxu0
    %v299 = vadd.f32 %v208, %v298
    %v300 = vpop.f32.mrb[0].mxu0
    %301 = vmatprep.mubr.f32.mxu0 0.0
    %v302 = vand.u32 %v131, 4294901760
    %303 = vmatmul.mubr.f32.gmra.mrb[0].mxu0 %v302
    %v304 = vpop.f32.mrb[0].mxu0
    %v305 = vadd.f32 %v218, %v304
    %v306 = vpop.f32.mrb[0].mxu0
    %307 = vmatprep.mubr.f32.mxu0 0.0
    %v308 = vand.u32 %v134, 4294901760
    %309 = vmatmul.mubr.f32.gmra.mrb[0].mxu0 %v308
    %v310 = vpop.f32.mrb[0].mxu0
    %v311 = vadd.f32 %v228, %v310
    %v312 = vpop.f32.mrb[0].mxu0
    %313 = vdwg.mxu0
    %314 = vmatprep.subr.mxu0 0.0
    %315 = vmatpush1.msra.mxu0 0.0
    %316 = vmatprep.subr.mxu0 0.0
    %317 = vmatpush1.msra.mxu0 0.0
    %318 = vmatprep.subr.mxu0 0.0
    %319 = vmatpush1.msra.mxu0 0.0
    %320 = vmatprep.subr.mxu0 0.0
    %321 = vmatpush1.msra.mxu0 0.0
    %322 = vmatprep.subr.mxu0 0.0
    %323 = vmatpush1.msra.mxu0 0.0
    %324 = vmatprep.subr.mxu0 0.0
    %325 = vmatpush1.msra.mxu0 0.0
    %326 = vmatprep.subr.mxu0 0.0
    %327 = vmatpush1.msra.mxu0 0.0
    %328 = vmatprep.subr.mxu0 0.0
    %329 = vmatpush1.msra.mxu0 0.0
    %330 = vmatprep.subr.mxu0 0.0
    %331 = vmatpush1.msra.mxu0 0.0
    %332 = vmatprep.subr.mxu0 0.0
    %333 = vmatpush1.msra.mxu0 0.0
    %334 = vmatprep.subr.mxu0 0.0
    %335 = vmatpush1.msra.mxu0 0.0
    %336 = vmatprep.subr.mxu0 0.0
    %337 = vmatpush1.msra.mxu0 0.0
    %338 = vmatprep.subr.mxu0 0.0
    %339 = vmatpush1.msra.mxu0 0.0
    %340 = vmatprep.subr.mxu0 0.0
    %341 = vmatpush1.msra.mxu0 0.0
    %342 = vmatprep.subr.mxu0 0.0
    %343 = vmatpush1.msra.mxu0 0.0
    %344 = vmatprep.subr.mxu0 0.0
    %345 = vmatpush1.msra.mxu0 0.0
    %346 = vmatprep.subr.mxu0 0.0
    %347 = vmatpush1.msra.mxu0 0.0
    %348 = vmatprep.subr.mxu0 0.0
    %349 = vmatpush1.msra.mxu0 0.0
    %350 = vmatprep.subr.mxu0 0.0
    %351 = vmatpush1.msra.mxu0 0.0
    %352 = vmatprep.subr.mxu0 0.0
    %353 = vmatpush1.msra.mxu0 0.0
    %354 = vmatprep.subr.mxu0 0.0
    %355 = vmatpush1.msra.mxu0 0.0
    %356 = vmatprep.subr.mxu0 0.0
    %357 = vmatpush1.msra.mxu0 0.0
    %358 = vmatprep.subr.mxu0 0.0
    %359 = vmatpush1.msra.mxu0 0.0
    %360 = vmatprep.subr.mxu0 0.0
    %361 = vmatpush1.msra.mxu0 0.0
    %362 = vmatprep.subr.mxu0 0.0
    %363 = vmatpush1.msra.mxu0 0.0
    %364 = vmatprep.subr.mxu0 0.0
    %365 = vmatpush1.msra.mxu0 0.0
    %366 = vmatprep.subr.mxu0 0.0
    %367 = vmatpush1.msra.mxu0 0.0
    %368 = vmatprep.subr.mxu0 0.0
    %369 = vmatpush1.msra.mxu0 0.0
    %370 = vmatprep.subr.mxu0 0.0
    %371 = vmatpush1.msra.mxu0 0.0
    %372 = vmatprep.subr.mxu0 0.0
    %373 = vmatpush1.msra.mxu0 0.0
    %374 = vmatprep.subr.mxu0 0.0
    %375 = vmatpush1.msra.mxu0 0.0
    %376 = vmatprep.subr.mxu0 0.0
    %377 = vmatpush1.msra.mxu0 0.0
    %378 = vmatprep.mubr.f32.mxu0 0.0
    %v379 = vand.u32 %v128, 4294901760
    %v380 = vsub.f32 %v128, %v379
    %381 = vmatmul.mubr.f32.gmra.mrb[0].mxu0 %v380
    %v382 = vpop.f32.mrb[0].mxu0
    %v383 = vadd.f32 %v299, %v382
    %v384 = vpop.f32.mrb[0].mxu0
    %385 = vmatprep.mubr.f32.mxu0 0.0
    %v386 = vand.u32 %v131, 4294901760
    %v387 = vsub.f32 %v131, %v386
    %388 = vmatmul.mubr.f32.gmra.mrb[0].mxu0 %v387
    %v389 = vpop.f32.mrb[0].mxu0
    %v390 = vadd.f32 %v305, %v389
    %v391 = vpop.f32.mrb[0].mxu0
    %392 = vmatprep.mubr.f32.mxu0 0.0
    %v393 = vand.u32 %v134, 4294901760
    %v394 = vsub.f32 %v134, %v393
    %395 = vmatmul.mubr.f32.gmra.mrb[0].mxu0 %v394
    %v396 = vpop.f32.mrb[0].mxu0
    %v397 = vadd.f32 %v311, %v396
    %v398 = vpop.f32.mrb[0].mxu0
    %399 = vdwg.mxu0
    %400 = vmatprep.subr.mxu0 0.0
    %401 = vmatpush1.msra.mxu0 1.0
    %402 = vmatprep.subr.mxu0 0.0
    %403 = vmatpush1.msra.mxu0 1.0
    %404 = vmatprep.subr.mxu0 0.0
    %405 = vmatpush1.msra.mxu0 1.0
    %406 = vmatprep.subr.mxu0 0.0
    %407 = vmatpush1.msra.mxu0 1.0
    %408 = vmatprep.subr.mxu0 0.0
    %409 = vmatpush1.msra.mxu0 0.0
    %410 = vmatprep.subr.mxu0 0.0
    %411 = vmatpush1.msra.mxu0 0.0
    %412 = vmatprep.subr.mxu0 0.0
    %413 = vmatpush1.msra.mxu0 0.0
    %414 = vmatprep.subr.mxu0 0.0
    %415 = vmatpush1.msra.mxu0 0.0
    %416 = vmatprep.subr.mxu0 0.0
    %417 = vmatpush1.msra.mxu0 0.0
    %418 = vmatprep.subr.mxu0 0.0
    %419 = vmatpush1.msra.mxu0 0.0
    %420 = vmatprep.subr.mxu0 0.0
    %421 = vmatpush1.msra.mxu0 0.0
    %422 = vmatprep.subr.mxu0 0.0
    %423 = vmatpush1.msra.mxu0 0.0
    %424 = vmatprep.subr.mxu0 0.0
    %425 = vmatpush1.msra.mxu0 0.0
    %426 = vmatprep.subr.mxu0 0.0
    %427 = vmatpush1.msra.mxu0 0.0
    %428 = vmatprep.subr.mxu0 0.0
    %429 = vmatpush1.msra.mxu0 0.0
    %430 = vmatprep.subr.mxu0 0.0
    %431 = vmatpush1.msra.mxu0 0.0
    %432 = vmatprep.subr.mxu0 0.0
    %433 = vmatpush1.msra.mxu0 0.0
    %434 = vmatprep.subr.mxu0 0.0
    %435 = vmatpush1.msra.mxu0 0.0
    %436 = vmatprep.subr.mxu0 0.0
    %437 = vmatpush1.msra.mxu0 0.0
    %438 = vmatprep.subr.mxu0 0.0
    %439 = vmatpush1.msra.mxu0 0.0
    %440 = vmatprep.subr.mxu0 0.0
    %441 = vmatpush1.msra.mxu0 0.0
    %442 = vmatprep.subr.mxu0 0.0
    %443 = vmatpush1.msra.mxu0 0.0
    %444 = vmatprep.subr.mxu0 0.0
    %445 = vmatpush1.msra.mxu0 0.0
    %446 = vmatprep.subr.mxu0 0.0
    %447 = vmatpush1.msra.mxu0 0.0
    %448 = vmatprep.subr.mxu0 0.0
    %449 = vmatpush1.msra.mxu0 0.0
    %450 = vmatprep.subr.mxu0 0.0
    %451 = vmatpush1.msra.mxu0 0.0
    %452 = vmatprep.subr.mxu0 0.0
    %453 = vmatpush1.msra.mxu0 0.0
    %454 = vmatprep.subr.mxu0 0.0
    %455 = vmatpush1.msra.mxu0 0.0
    %456 = vmatprep.subr.mxu0 0.0
    %457 = vmatpush1.msra.mxu0 0.0
    %458 = vmatprep.subr.mxu0 0.0
    %459 = vmatpush1.msra.mxu0 0.0
    %460 = vmatprep.subr.mxu0 0.0
    %461 = vmatpush1.msra.mxu0 0.0
    %462 = vmatprep.subr.mxu0 0.0
    %463 = vmatpush1.msra.mxu0 0.0
    %464 = vmatprep.mubr.f32.mxu0 0.0
    %v465 = vand.u32 %v128, 4294901760
    %v466 = vsub.f32 %v128, %v465
    %v467 = vand.u32 %v466, 4294901760
    %468 = vmatmul.mubr.f32.gmra.mrb[0].mxu0 %v467
    %v469 = vpop.f32.mrb[0].mxu0
    %v470 = vadd.f32 %v383, %v469
    %v471 = vpop.f32.mrb[0].mxu0
    %472 = vmatprep.mubr.f32.mxu0 0.0
    %v473 = vand.u32 %v131, 4294901760
    %v474 = vsub.f32 %v131, %v473
    %v475 = vand.u32 %v474, 4294901760
    %476 = vmatmul.mubr.f32.gmra.mrb[0].mxu0 %v475
    %v477 = vpop.f32.mrb[0].mxu0
    %v478 = vadd.f32 %v390, %v477
    %v479 = vpop.f32.mrb[0].mxu0
    %480 = vmatprep.mubr.f32.mxu0 0.0
    %v481 = vand.u32 %v134, 4294901760
    %v482 = vsub.f32 %v134, %v481
    %v483 = vand.u32 %v482, 4294901760
    %484 = vmatmul.mubr.f32.gmra.mrb[0].mxu0 %v483
    %v485 = vpop.f32.mrb[0].mxu0
    %v486 = vadd.f32 %v397, %v485
    %v487 = vpop.f32.mrb[0].mxu0
    %488 = vdwg.mxu0
    %489 = vmatprep.subr.mxu0 0.0
    %490 = vmatpush1.msra.mxu0 0.0
    %491 = vmatprep.subr.mxu0 0.0
    %492 = vmatpush1.msra.mxu0 0.0
    %493 = vmatprep.subr.mxu0 0.0
    %494 = vmatpush1.msra.mxu0 0.0
    %495 = vmatprep.subr.mxu0 0.0
    %496 = vmatpush1.msra.mxu0 0.0
    %497 = vmatprep.subr.mxu0 0.0
    %498 = vmatpush1.msra.mxu0 0.0
    %499 = vmatprep.subr.mxu0 0.0
    %500 = vmatpush1.msra.mxu0 0.0
    %501 = vmatprep.subr.mxu0 0.0
    %502 = vmatpush1.msra.mxu0 0.0
    %503 = vmatprep.subr.mxu0 0.0
    %504 = vmatpush1.msra.mxu0 0.0
    %505 = vmatprep.subr.mxu0 0.0
    %506 = vmatpush1.msra.mxu0 0.0
    %507 = vmatprep.subr.mxu0 0.0
    %508 = vmatpush1.msra.mxu0 0.0
    %509 = vmatprep.subr.mxu0 0.0
    %510 = vmatpush1.msra.mxu0 0.0
    %511 = vmatprep.subr.mxu0 0.0
    %512 = vmatpush1.msra.mxu0 0.0
    %513 = vmatprep.subr.mxu0 0.0
    %514 = vmatpush1.msra.mxu0 0.0
    %515 = vmatprep.subr.mxu0 0.0
    %516 = vmatpush1.msra.mxu0 0.0
    %517 = vmatprep.subr.mxu0 0.0
    %518 = vmatpush1.msra.mxu0 0.0
    %519 = vmatprep.subr.mxu0 0.0
    %520 = vmatpush1.msra.mxu0 0.0
    %521 = vmatprep.subr.mxu0 0.0
    %522 = vmatpush1.msra.mxu0 0.0
    %523 = vmatprep.subr.mxu0 0.0
    %524 = vmatpush1.msra.mxu0 0.0
    %525 = vmatprep.subr.mxu0 0.0
    %526 = vmatpush1.msra.mxu0 0.0
    %527 = vmatprep.subr.mxu0 0.0
    %528 = vmatpush1.msra.mxu0 0.0
    %529 = vmatprep.subr.mxu0 0.0
    %530 = vmatpush1.msra.mxu0 0.0
    %531 = vmatprep.subr.mxu0 0.0
    %532 = vmatpush1.msra.mxu0 0.0
    %533 = vmatprep.subr.mxu0 0.0
    %534 = vmatpush1.msra.mxu0 0.0
    %535 = vmatprep.subr.mxu0 0.0
    %536 = vmatpush1.msra.mxu0 0.0
    %537 = vmatprep.subr.mxu0 0.0
    %538 = vmatpush1.msra.mxu0 0.0
    %539 = vmatprep.subr.mxu0 0.0
    %540 = vmatpush1.msra.mxu0 0.0
    %541 = vmatprep.subr.mxu0 0.0
    %542 = vmatpush1.msra.mxu0 0.0
    %543 = vmatprep.subr.mxu0 0.0
    %544 = vmatpush1.msra.mxu0 0.0
    %545 = vmatprep.subr.mxu0 0.0
    %546 = vmatpush1.msra.mxu0 0.0
    %547 = vmatprep.subr.mxu0 0.0
    %548 = vmatpush1.msra.mxu0 0.0
    %549 = vmatprep.subr.mxu0 0.0
    %550 = vmatpush1.msra.mxu0 0.0
    %551 = vmatprep.subr.mxu0 0.0
    %552 = vmatpush1.msra.mxu0 0.0
    %553 = vmatprep.mubr.f32.mxu0 0.0
    %v554 = vand.u32 %v128, 4294901760
    %555 = vmatmul.mubr.f32.gmra.mrb[0].mxu0 %v554
    %v556 = vpop.f32.mrb[0].mxu0
    %v557 = vadd.f32 %v470, %v556
    %v558 = vpop.f32.mrb[0].mxu0
    %559 = vmatprep.mubr.f32.mxu0 0.0
    %v560 = vand.u32 %v131, 4294901760
    %561 = vmatmul.mubr.f32.gmra.mrb[0].mxu0 %v560
    %v562 = vpop.f32.mrb[0].mxu0
    %v563 = vadd.f32 %v478, %v562
    %v564 = vpop.f32.mrb[0].mxu0
    %565 = vmatprep.mubr.f32.mxu0 0.0
    %v566 = vand.u32 %v134, 4294901760
    %567 = vmatmul.mubr.f32.gmra.mrb[0].mxu0 %v566
    %v568 = vpop.f32.mrb[0].mxu0
    %v569 = vadd.f32 %v486, %v568
    %v570 = vpop.f32.mrb[0].mxu0
    %571 = vdwg.mxu0
    %572 = vmatprep.subr.mxu0 0.0
    %573 = vmatpush1.msra.mxu0 1.0
    %574 = vmatprep.subr.mxu0 0.0
    %575 = vmatpush1.msra.mxu0 1.0
    %576 = vmatprep.subr.mxu0 0.0
    %577 = vmatpush1.msra.mxu0 1.0
    %578 = vmatprep.subr.mxu0 0.0
    %579 = vmatpush1.msra.mxu0 1.0
    %580 = vmatprep.subr.mxu0 0.0
    %581 = vmatpush1.msra.mxu0 0.0
    %582 = vmatprep.subr.mxu0 0.0
    %583 = vmatpush1.msra.mxu0 0.0
    %584 = vmatprep.subr.mxu0 0.0
    %585 = vmatpush1.msra.mxu0 0.0
    %586 = vmatprep.subr.mxu0 0.0
    %587 = vmatpush1.msra.mxu0 0.0
    %588 = vmatprep.subr.mxu0 0.0
    %589 = vmatpush1.msra.mxu0 0.0
    %590 = vmatprep.subr.mxu0 0.0
    %591 = vmatpush1.msra.mxu0 0.0
    %592 = vmatprep.subr.mxu0 0.0
    %593 = vmatpush1.msra.mxu0 0.0
    %594 = vmatprep.subr.mxu0 0.0
    %595 = vmatpush1.msra.mxu0 0.0
    %596 = vmatprep.subr.mxu0 0.0
    %597 = vmatpush1.msra.mxu0 0.0
    %598 = vmatprep.subr.mxu0 0.0
    %599 = vmatpush1.msra.mxu0 0.0
    %600 = vmatprep.subr.mxu0 0.0
    %601 = vmatpush1.msra.mxu0 0.0
    %602 = vmatprep.subr.mxu0 0.0
    %603 = vmatpush1.msra.mxu0 0.0
    %604 = vmatprep.subr.mxu0 0.0
    %605 = vmatpush1.msra.mxu0 0.0
    %606 = vmatprep.subr.mxu0 0.0
    %607 = vmatpush1.msra.mxu0 0.0
    %608 = vmatprep.subr.mxu0 0.0
    %609 = vmatpush1.msra.mxu0 0.0
    %610 = vmatprep.subr.mxu0 0.0
    %611 = vmatpush1.msra.mxu0 0.0
    %612 = vmatprep.subr.mxu0 0.0
    %613 = vmatpush1.msra.mxu0 0.0
    %614 = vmatprep.subr.mxu0 0.0
    %615 = vmatpush1.msra.mxu0 0.0
    %616 = vmatprep.subr.mxu0 0.0
    %617 = vmatpush1.msra.mxu0 0.0
    %618 = vmatprep.subr.mxu0 0.0
    %619 = vmatpush1.msra.mxu0 0.0
    %620 = vmatprep.subr.mxu0 0.0
    %621 = vmatpush1.msra.mxu0 0.0
    %622 = vmatprep.subr.mxu0 0.0
    %623 = vmatpush1.msra.mxu0 0.0
    %624 = vmatprep.subr.mxu0 0.0
    %625 = vmatpush1.msra.mxu0 0.0
    %626 = vmatprep.subr.mxu0 0.0
    %627 = vmatpush1.msra.mxu0 0.0
    %628 = vmatprep.subr.mxu0 0.0
    %629 = vmatpush1.msra.mxu0 0.0
    %630 = vmatprep.subr.mxu0 0.0
    %631 = vmatpush1.msra.mxu0 0.0
    %632 = vmatprep.subr.mxu0 0.0
    %633 = vmatpush1.msra.mxu0 0.0
    %634 = vmatprep.subr.mxu0 0.0
    %635 = vmatpush1.msra.mxu0 0.0
    %636 = vmatprep.mubr.f32.mxu0 0.0
    %v637 = vand.u32 %v128, 4294901760
    %638 = vmatmul.mubr.f32.gmra.mrb[0].mxu0 %v637
    %v639 = vpop.f32.mrb[0].mxu0
    %v640 = vadd.f32 %v557, %v639
    %v641 = vpop.f32.mrb[0].mxu0
    %642 = vmatprep.mubr.f32.mxu0 0.0
    %v643 = vand.u32 %v131, 4294901760
    %644 = vmatmul.mubr.f32.gmra.mrb[0].mxu0 %v643
    %v645 = vpop.f32.mrb[0].mxu0
    %v646 = vadd.f32 %v563, %v645
    %v647 = vpop.f32.mrb[0].mxu0
    %648 = vmatprep.mubr.f32.mxu0 0.0
    %v649 = vand.u32 %v134, 4294901760
    %650 = vmatmul.mubr.f32.gmra.mrb[0].mxu0 %v649
    %v651 = vpop.f32.mrb[0].mxu0
    %v652 = vadd.f32 %v569, %v651
    %v653 = vpop.f32.mrb[0].mxu0
    %654 = vdwg.mxu0
    %v656 = vsel %vm91, %v124, 0
    %v659 = vsel %vm91, %v125, 0
    %v662 = vsel %vm91, %v126, 0
    %664 = vmatprep.subr.mxu0 0.0
    %665 = vmatpush1.msra.mxu0 1.0
    %666 = vmatprep.subr.mxu0 0.0
    %667 = vmatpush1.msra.mxu0 1.0
    %668 = vmatprep.subr.mxu0 0.0
    %669 = vmatpush1.msra.mxu0 1.0
    %670 = vmatprep.subr.mxu0 0.0
    %671 = vmatpush1.msra.mxu0 1.0
    %672 = vmatprep.subr.mxu0 0.0
    %673 = vmatpush1.msra.mxu0 0.0
    %674 = vmatprep.subr.mxu0 0.0
    %675 = vmatpush1.msra.mxu0 0.0
    %676 = vmatprep.subr.mxu0 0.0
    %677 = vmatpush1.msra.mxu0 0.0
    %678 = vmatprep.subr.mxu0 0.0
    %679 = vmatpush1.msra.mxu0 0.0
    %680 = vmatprep.subr.mxu0 0.0
    %681 = vmatpush1.msra.mxu0 0.0
    %682 = vmatprep.subr.mxu0 0.0
    %683 = vmatpush1.msra.mxu0 0.0
    %684 = vmatprep.subr.mxu0 0.0
    %685 = vmatpush1.msra.mxu0 0.0
    %686 = vmatprep.subr.mxu0 0.0
    %687 = vmatpush1.msra.mxu0 0.0
    %688 = vmatprep.subr.mxu0 0.0
    %689 = vmatpush1.msra.mxu0 0.0
    %690 = vmatprep.subr.mxu0 0.0
    %691 = vmatpush1.msra.mxu0 0.0
    %692 = vmatprep.subr.mxu0 0.0
    %693 = vmatpush1.msra.mxu0 0.0
    %694 = vmatprep.subr.mxu0 0.0
    %695 = vmatpush1.msra.mxu0 0.0
    %696 = vmatprep.subr.mxu0 0.0
    %697 = vmatpush1.msra.mxu0 0.0
    %698 = vmatprep.subr.mxu0 0.0
    %699 = vmatpush1.msra.mxu0 0.0
    %700 = vmatprep.subr.mxu0 0.0
    %701 = vmatpush1.msra.mxu0 0.0
    %702 = vmatprep.subr.mxu0 0.0
    %703 = vmatpush1.msra.mxu0 0.0
    %704 = vmatprep.subr.mxu0 0.0
    %705 = vmatpush1.msra.mxu0 0.0
    %706 = vmatprep.subr.mxu0 0.0
    %707 = vmatpush1.msra.mxu0 0.0
    %708 = vmatprep.subr.mxu0 0.0
    %709 = vmatpush1.msra.mxu0 0.0
    %710 = vmatprep.subr.mxu0 0.0
    %711 = vmatpush1.msra.mxu0 0.0
    %712 = vmatprep.subr.mxu0 0.0
    %713 = vmatpush1.msra.mxu0 0.0
    %714 = vmatprep.subr.mxu0 0.0
    %715 = vmatpush1.msra.mxu0 0.0
    %716 = vmatprep.subr.mxu0 0.0
    %717 = vmatpush1.msra.mxu0 0.0
    %718 = vmatprep.subr.mxu0 0.0
    %719 = vmatpush1.msra.mxu0 0.0
    %720 = vmatprep.subr.mxu0 0.0
    %721 = vmatpush1.msra.mxu0 0.0
    %722 = vmatprep.subr.mxu0 0.0
    %723 = vmatpush1.msra.mxu0 0.0
    %724 = vmatprep.subr.mxu0 0.0
    %725 = vmatpush1.msra.mxu0 0.0
    %726 = vmatprep.subr.mxu0 0.0
    %727 = vmatpush1.msra.mxu0 0.0
    %728 = vmatprep.mubr.f32.mxu0 0.0
    %v729 = vand.u32 %v656, 4294901760
    %v730 = vsub.f32 %v656, %v729
    %v731 = vand.u32 %v730, 4294901760
    %v732 = vsub.f32 %v730, %v731
    %v733 = vand.u32 %v732, 4294901760
    %734 = vmatmul.mubr.f32.gmra.mrb[0].mxu0 %v733
    %v735 = vpop.f32.mrb[0].mxu0
    %v736 = vadd.f32 0.0, %v735
    %v737 = vpop.f32.mrb[0].mxu0
    %738 = vmatprep.mubr.f32.mxu0 0.0
    %v739 = vand.u32 %v659, 4294901760
    %v740 = vsub.f32 %v659, %v739
    %v741 = vand.u32 %v740, 4294901760
    %v742 = vsub.f32 %v740, %v741
    %v743 = vand.u32 %v742, 4294901760
    %744 = vmatmul.mubr.f32.gmra.mrb[0].mxu0 %v743
    %v745 = vpop.f32.mrb[0].mxu0
    %v746 = vadd.f32 0.0, %v745
    %v747 = vpop.f32.mrb[0].mxu0
    %748 = vmatprep.mubr.f32.mxu0 0.0
    %v749 = vand.u32 %v662, 4294901760
    %v750 = vsub.f32 %v662, %v749
    %v751 = vand.u32 %v750, 4294901760
    %v752 = vsub.f32 %v750, %v751
    %v753 = vand.u32 %v752, 4294901760
    %754 = vmatmul.mubr.f32.gmra.mrb[0].mxu0 %v753
    %v755 = vpop.f32.mrb[0].mxu0
    %v756 = vadd.f32 0.0, %v755
    %v757 = vpop.f32.mrb[0].mxu0
    %758 = vdwg.mxu0
    %759 = vmatprep.subr.mxu0 0.0
    %760 = vmatpush1.msra.mxu0 0.0
    %761 = vmatprep.subr.mxu0 0.0
    %762 = vmatpush1.msra.mxu0 0.0
    %763 = vmatprep.subr.mxu0 0.0
    %764 = vmatpush1.msra.mxu0 0.0
    %765 = vmatprep.subr.mxu0 0.0
    %766 = vmatpush1.msra.mxu0 0.0
    %767 = vmatprep.subr.mxu0 0.0
    %768 = vmatpush1.msra.mxu0 0.0
    %769 = vmatprep.subr.mxu0 0.0
    %770 = vmatpush1.msra.mxu0 0.0
    %771 = vmatprep.subr.mxu0 0.0
    %772 = vmatpush1.msra.mxu0 0.0
    %773 = vmatprep.subr.mxu0 0.0
    %774 = vmatpush1.msra.mxu0 0.0
    %775 = vmatprep.subr.mxu0 0.0
    %776 = vmatpush1.msra.mxu0 0.0
    %777 = vmatprep.subr.mxu0 0.0
    %778 = vmatpush1.msra.mxu0 0.0
    %779 = vmatprep.subr.mxu0 0.0
    %780 = vmatpush1.msra.mxu0 0.0
    %781 = vmatprep.subr.mxu0 0.0
    %782 = vmatpush1.msra.mxu0 0.0
    %783 = vmatprep.subr.mxu0 0.0
    %784 = vmatpush1.msra.mxu0 0.0
    %785 = vmatprep.subr.mxu0 0.0
    %786 = vmatpush1.msra.mxu0 0.0
    %787 = vmatprep.subr.mxu0 0.0
    %788 = vmatpush1.msra.mxu0 0.0
    %789 = vmatprep.subr.mxu0 0.0
    %790 = vmatpush1.msra.mxu0 0.0
    %791 = vmatprep.subr.mxu0 0.0
    %792 = vmatpush1.msra.mxu0 0.0
    %793 = vmatprep.subr.mxu0 0.0
    %794 = vmatpush1.msra.mxu0 0.0
    %795 = vmatprep.subr.mxu0 0.0
    %796 = vmatpush1.msra.mxu0 0.0
    %797 = vmatprep.subr.mxu0 0.0
    %798 = vmatpush1.msra.mxu0 0.0
    %799 = vmatprep.subr.mxu0 0.0
    %800 = vmatpush1.msra.mxu0 0.0
    %801 = vmatprep.subr.mxu0 0.0
    %802 = vmatpush1.msra.mxu0 0.0
    %803 = vmatprep.subr.mxu0 0.0
    %804 = vmatpush1.msra.mxu0 0.0
    %805 = vmatprep.subr.mxu0 0.0
    %806 = vmatpush1.msra.mxu0 0.0
    %807 = vmatprep.subr.mxu0 0.0
    %808 = vmatpush1.msra.mxu0 0.0
    %809 = vmatprep.subr.mxu0 0.0
    %810 = vmatpush1.msra.mxu0 0.0
    %811 = vmatprep.subr.mxu0 0.0
    %812 = vmatpush1.msra.mxu0 0.0
    %813 = vmatprep.subr.mxu0 0.0
    %814 = vmatpush1.msra.mxu0 0.0
    %815 = vmatprep.subr.mxu0 0.0
    %816 = vmatpush1.msra.mxu0 0.0
    %817 = vmatprep.subr.mxu0 0.0
    %818 = vmatpush1.msra.mxu0 0.0
    %819 = vmatprep.subr.mxu0 0.0
    %820 = vmatpush1.msra.mxu0 0.0
    %821 = vmatprep.subr.mxu0 0.0
    %822 = vmatpush1.msra.mxu0 0.0
    %823 = vmatprep.mubr.f32.mxu0 0.0
    %v824 = vand.u32 %v656, 4294901760
    %825 = vmatmul.mubr.f32.gmra.mrb[0].mxu0 %v824
    %v826 = vpop.f32.mrb[0].mxu0
    %v827 = vadd.f32 %v736, %v826
    %v828 = vpop.f32.mrb[0].mxu0
    %829 = vmatprep.mubr.f32.mxu0 0.0
    %v830 = vand.u32 %v659, 4294901760
    %831 = vmatmul.mubr.f32.gmra.mrb[0].mxu0 %v830
    %v832 = vpop.f32.mrb[0].mxu0
    %v833 = vadd.f32 %v746, %v832
    %v834 = vpop.f32.mrb[0].mxu0
    %835 = vmatprep.mubr.f32.mxu0 0.0
    %v836 = vand.u32 %v662, 4294901760
    %837 = vmatmul.mubr.f32.gmra.mrb[0].mxu0 %v836
    %v838 = vpop.f32.mrb[0].mxu0
    %v839 = vadd.f32 %v756, %v838
    %v840 = vpop.f32.mrb[0].mxu0
    %841 = vdwg.mxu0
    %842 = vmatprep.subr.mxu0 0.0
    %843 = vmatpush1.msra.mxu0 0.0
    %844 = vmatprep.subr.mxu0 0.0
    %845 = vmatpush1.msra.mxu0 0.0
    %846 = vmatprep.subr.mxu0 0.0
    %847 = vmatpush1.msra.mxu0 0.0
    %848 = vmatprep.subr.mxu0 0.0
    %849 = vmatpush1.msra.mxu0 0.0
    %850 = vmatprep.subr.mxu0 0.0
    %851 = vmatpush1.msra.mxu0 0.0
    %852 = vmatprep.subr.mxu0 0.0
    %853 = vmatpush1.msra.mxu0 0.0
    %854 = vmatprep.subr.mxu0 0.0
    %855 = vmatpush1.msra.mxu0 0.0
    %856 = vmatprep.subr.mxu0 0.0
    %857 = vmatpush1.msra.mxu0 0.0
    %858 = vmatprep.subr.mxu0 0.0
    %859 = vmatpush1.msra.mxu0 0.0
    %860 = vmatprep.subr.mxu0 0.0
    %861 = vmatpush1.msra.mxu0 0.0
    %862 = vmatprep.subr.mxu0 0.0
    %863 = vmatpush1.msra.mxu0 0.0
    %864 = vmatprep.subr.mxu0 0.0
    %865 = vmatpush1.msra.mxu0 0.0
    %866 = vmatprep.subr.mxu0 0.0
    %867 = vmatpush1.msra.mxu0 0.0
    %868 = vmatprep.subr.mxu0 0.0
    %869 = vmatpush1.msra.mxu0 0.0
    %870 = vmatprep.subr.mxu0 0.0
    %871 = vmatpush1.msra.mxu0 0.0
    %872 = vmatprep.subr.mxu0 0.0
    %873 = vmatpush1.msra.mxu0 0.0
    %874 = vmatprep.subr.mxu0 0.0
    %875 = vmatpush1.msra.mxu0 0.0
    %876 = vmatprep.subr.mxu0 0.0
    %877 = vmatpush1.msra.mxu0 0.0
    %878 = vmatprep.subr.mxu0 0.0
    %879 = vmatpush1.msra.mxu0 0.0
    %880 = vmatprep.subr.mxu0 0.0
    %881 = vmatpush1.msra.mxu0 0.0
    %882 = vmatprep.subr.mxu0 0.0
    %883 = vmatpush1.msra.mxu0 0.0
    %884 = vmatprep.subr.mxu0 0.0
    %885 = vmatpush1.msra.mxu0 0.0
    %886 = vmatprep.subr.mxu0 0.0
    %887 = vmatpush1.msra.mxu0 0.0
    %888 = vmatprep.subr.mxu0 0.0
    %889 = vmatpush1.msra.mxu0 0.0
    %890 = vmatprep.subr.mxu0 0.0
    %891 = vmatpush1.msra.mxu0 0.0
    %892 = vmatprep.subr.mxu0 0.0
    %893 = vmatpush1.msra.mxu0 0.0
    %894 = vmatprep.subr.mxu0 0.0
    %895 = vmatpush1.msra.mxu0 0.0
    %896 = vmatprep.subr.mxu0 0.0
    %897 = vmatpush1.msra.mxu0 0.0
    %898 = vmatprep.subr.mxu0 0.0
    %899 = vmatpush1.msra.mxu0 0.0
    %900 = vmatprep.subr.mxu0 0.0
    %901 = vmatpush1.msra.mxu0 0.0
    %902 = vmatprep.subr.mxu0 0.0
    %903 = vmatpush1.msra.mxu0 0.0
    %904 = vmatprep.subr.mxu0 0.0
    %905 = vmatpush1.msra.mxu0 0.0
    %906 = vmatprep.mubr.f32.mxu0 0.0
    %v907 = vand.u32 %v656, 4294901760
    %v908 = vsub.f32 %v656, %v907
    %909 = vmatmul.mubr.f32.gmra.mrb[0].mxu0 %v908
    %v910 = vpop.f32.mrb[0].mxu0
    %v911 = vadd.f32 %v827, %v910
    %v912 = vpop.f32.mrb[0].mxu0
    %913 = vmatprep.mubr.f32.mxu0 0.0
    %v914 = vand.u32 %v659, 4294901760
    %v915 = vsub.f32 %v659, %v914
    %916 = vmatmul.mubr.f32.gmra.mrb[0].mxu0 %v915
    %v917 = vpop.f32.mrb[0].mxu0
    %v918 = vadd.f32 %v833, %v917
    %v919 = vpop.f32.mrb[0].mxu0
    %920 = vmatprep.mubr.f32.mxu0 0.0
    %v921 = vand.u32 %v662, 4294901760
    %v922 = vsub.f32 %v662, %v921
    %923 = vmatmul.mubr.f32.gmra.mrb[0].mxu0 %v922
    %v924 = vpop.f32.mrb[0].mxu0
    %v925 = vadd.f32 %v839, %v924
    %v926 = vpop.f32.mrb[0].mxu0
    %927 = vdwg.mxu0
    %928 = vmatprep.subr.mxu0 0.0
    %929 = vmatpush1.msra.mxu0 1.0
    %930 = vmatprep.subr.mxu0 0.0
    %931 = vmatpush1.msra.mxu0 1.0
    %932 = vmatprep.subr.mxu0 0.0
    %933 = vmatpush1.msra.mxu0 1.0
    %934 = vmatprep.subr.mxu0 0.0
    %935 = vmatpush1.msra.mxu0 1.0
    %936 = vmatprep.subr.mxu0 0.0
    %937 = vmatpush1.msra.mxu0 0.0
    %938 = vmatprep.subr.mxu0 0.0
    %939 = vmatpush1.msra.mxu0 0.0
    %940 = vmatprep.subr.mxu0 0.0
    %941 = vmatpush1.msra.mxu0 0.0
    %942 = vmatprep.subr.mxu0 0.0
    %943 = vmatpush1.msra.mxu0 0.0
    %944 = vmatprep.subr.mxu0 0.0
    %945 = vmatpush1.msra.mxu0 0.0
    %946 = vmatprep.subr.mxu0 0.0
    %947 = vmatpush1.msra.mxu0 0.0
    %948 = vmatprep.subr.mxu0 0.0
    %949 = vmatpush1.msra.mxu0 0.0
    %950 = vmatprep.subr.mxu0 0.0
    %951 = vmatpush1.msra.mxu0 0.0
    %952 = vmatprep.subr.mxu0 0.0
    %953 = vmatpush1.msra.mxu0 0.0
    %954 = vmatprep.subr.mxu0 0.0
    %955 = vmatpush1.msra.mxu0 0.0
    %956 = vmatprep.subr.mxu0 0.0
    %957 = vmatpush1.msra.mxu0 0.0
    %958 = vmatprep.subr.mxu0 0.0
    %959 = vmatpush1.msra.mxu0 0.0
    %960 = vmatprep.subr.mxu0 0.0
    %961 = vmatpush1.msra.mxu0 0.0
    %962 = vmatprep.subr.mxu0 0.0
    %963 = vmatpush1.msra.mxu0 0.0
    %964 = vmatprep.subr.mxu0 0.0
    %965 = vmatpush1.msra.mxu0 0.0
    %966 = vmatprep.subr.mxu0 0.0
    %967 = vmatpush1.msra.mxu0 0.0
    %968 = vmatprep.subr.mxu0 0.0
    %969 = vmatpush1.msra.mxu0 0.0
    %970 = vmatprep.subr.mxu0 0.0
    %971 = vmatpush1.msra.mxu0 0.0
    %972 = vmatprep.subr.mxu0 0.0
    %973 = vmatpush1.msra.mxu0 0.0
    %974 = vmatprep.subr.mxu0 0.0
    %975 = vmatpush1.msra.mxu0 0.0
    %976 = vmatprep.subr.mxu0 0.0
    %977 = vmatpush1.msra.mxu0 0.0
    %978 = vmatprep.subr.mxu0 0.0
    %979 = vmatpush1.msra.mxu0 0.0
    %980 = vmatprep.subr.mxu0 0.0
    %981 = vmatpush1.msra.mxu0 0.0
    %982 = vmatprep.subr.mxu0 0.0
    %983 = vmatpush1.msra.mxu0 0.0
    %984 = vmatprep.subr.mxu0 0.0
    %985 = vmatpush1.msra.mxu0 0.0
    %986 = vmatprep.subr.mxu0 0.0
    %987 = vmatpush1.msra.mxu0 0.0
    %988 = vmatprep.subr.mxu0 0.0
    %989 = vmatpush1.msra.mxu0 0.0
    %990 = vmatprep.subr.mxu0 0.0
    %991 = vmatpush1.msra.mxu0 0.0
    %992 = vmatprep.mubr.f32.mxu0 0.0
    %v993 = vand.u32 %v656, 4294901760
    %v994 = vsub.f32 %v656, %v993
    %v995 = vand.u32 %v994, 4294901760
    %996 = vmatmul.mubr.f32.gmra.mrb[0].mxu0 %v995
    %v997 = vpop.f32.mrb[0].mxu0
    %v998 = vadd.f32 %v911, %v997
    %v999 = vpop.f32.mrb[0].mxu0
    %1000 = vmatprep.mubr.f32.mxu0 0.0
    %v1001 = vand.u32 %v659, 4294901760
    %v1002 = vsub.f32 %v659, %v1001
    %v1003 = vand.u32 %v1002, 4294901760
    %1004 = vmatmul.mubr.f32.gmra.mrb[0].mxu0 %v1003
    %v1005 = vpop.f32.mrb[0].mxu0
    %v1006 = vadd.f32 %v918, %v1005
    %v1007 = vpop.f32.mrb[0].mxu0
    %1008 = vmatprep.mubr.f32.mxu0 0.0
    %v1009 = vand.u32 %v662, 4294901760
    %v1010 = vsub.f32 %v662, %v1009
    %v1011 = vand.u32 %v1010, 4294901760
    %1012 = vmatmul.mubr.f32.gmra.mrb[0].mxu0 %v1011
    %v1013 = vpop.f32.mrb[0].mxu0
    %v1014 = vadd.f32 %v925, %v1013
    %v1015 = vpop.f32.mrb[0].mxu0
    %1016 = vdwg.mxu0
    %1017 = vmatprep.subr.mxu0 0.0
    %1018 = vmatpush1.msra.mxu0 0.0
    %1019 = vmatprep.subr.mxu0 0.0
    %1020 = vmatpush1.msra.mxu0 0.0
    %1021 = vmatprep.subr.mxu0 0.0
    %1022 = vmatpush1.msra.mxu0 0.0
    %1023 = vmatprep.subr.mxu0 0.0
    %1024 = vmatpush1.msra.mxu0 0.0
    %1025 = vmatprep.subr.mxu0 0.0
    %1026 = vmatpush1.msra.mxu0 0.0
    %1027 = vmatprep.subr.mxu0 0.0
    %1028 = vmatpush1.msra.mxu0 0.0
    %1029 = vmatprep.subr.mxu0 0.0
    %1030 = vmatpush1.msra.mxu0 0.0
    %1031 = vmatprep.subr.mxu0 0.0
    %1032 = vmatpush1.msra.mxu0 0.0
    %1033 = vmatprep.subr.mxu0 0.0
    %1034 = vmatpush1.msra.mxu0 0.0
    %1035 = vmatprep.subr.mxu0 0.0
    %1036 = vmatpush1.msra.mxu0 0.0
    %1037 = vmatprep.subr.mxu0 0.0
    %1038 = vmatpush1.msra.mxu0 0.0
    %1039 = vmatprep.subr.mxu0 0.0
    %1040 = vmatpush1.msra.mxu0 0.0
    %1041 = vmatprep.subr.mxu0 0.0
    %1042 = vmatpush1.msra.mxu0 0.0
    %1043 = vmatprep.subr.mxu0 0.0
    %1044 = vmatpush1.msra.mxu0 0.0
    %1045 = vmatprep.subr.mxu0 0.0
    %1046 = vmatpush1.msra.mxu0 0.0
    %1047 = vmatprep.subr.mxu0 0.0
    %1048 = vmatpush1.msra.mxu0 0.0
    %1049 = vmatprep.subr.mxu0 0.0
    %1050 = vmatpush1.msra.mxu0 0.0
    %1051 = vmatprep.subr.mxu0 0.0
    %1052 = vmatpush1.msra.mxu0 0.0
    %1053 = vmatprep.subr.mxu0 0.0
    %1054 = vmatpush1.msra.mxu0 0.0
    %1055 = vmatprep.subr.mxu0 0.0
    %1056 = vmatpush1.msra.mxu0 0.0
    %1057 = vmatprep.subr.mxu0 0.0
    %1058 = vmatpush1.msra.mxu0 0.0
    %1059 = vmatprep.subr.mxu0 0.0
    %1060 = vmatpush1.msra.mxu0 0.0
    %1061 = vmatprep.subr.mxu0 0.0
    %1062 = vmatpush1.msra.mxu0 0.0
    %1063 = vmatprep.subr.mxu0 0.0
    %1064 = vmatpush1.msra.mxu0 0.0
    %1065 = vmatprep.subr.mxu0 0.0
    %1066 = vmatpush1.msra.mxu0 0.0
    %1067 = vmatprep.subr.mxu0 0.0
    %1068 = vmatpush1.msra.mxu0 0.0
    %1069 = vmatprep.subr.mxu0 0.0
    %1070 = vmatpush1.msra.mxu0 0.0
    %1071 = vmatprep.subr.mxu0 0.0
    %1072 = vmatpush1.msra.mxu0 0.0
    %1073 = vmatprep.subr.mxu0 0.0
    %1074 = vmatpush1.msra.mxu0 0.0
    %1075 = vmatprep.subr.mxu0 0.0
    %1076 = vmatpush1.msra.mxu0 0.0
    %1077 = vmatprep.subr.mxu0 0.0
    %1078 = vmatpush1.msra.mxu0 0.0
    %1079 = vmatprep.subr.mxu0 0.0
    %1080 = vmatpush1.msra.mxu0 0.0
    %1081 = vmatprep.mubr.f32.mxu0 0.0
    %v1082 = vand.u32 %v656, 4294901760
    %1083 = vmatmul.mubr.f32.gmra.mrb[0].mxu0 %v1082
    %v1084 = vpop.f32.mrb[0].mxu0
    %v1085 = vadd.f32 %v998, %v1084
    %v1086 = vpop.f32.mrb[0].mxu0
    %1087 = vmatprep.mubr.f32.mxu0 0.0
    %v1088 = vand.u32 %v659, 4294901760
    %1089 = vmatmul.mubr.f32.gmra.mrb[0].mxu0 %v1088
    %v1090 = vpop.f32.mrb[0].mxu0
    %v1091 = vadd.f32 %v1006, %v1090
    %v1092 = vpop.f32.mrb[0].mxu0
    %1093 = vmatprep.mubr.f32.mxu0 0.0
    %v1094 = vand.u32 %v662, 4294901760
    %1095 = vmatmul.mubr.f32.gmra.mrb[0].mxu0 %v1094
    %v1096 = vpop.f32.mrb[0].mxu0
    %v1097 = vadd.f32 %v1014, %v1096
    %v1098 = vpop.f32.mrb[0].mxu0
    %1099 = vdwg.mxu0
    %1100 = vmatprep.subr.mxu0 0.0
    %1101 = vmatpush1.msra.mxu0 1.0
    %1102 = vmatprep.subr.mxu0 0.0
    %1103 = vmatpush1.msra.mxu0 1.0
    %1104 = vmatprep.subr.mxu0 0.0
    %1105 = vmatpush1.msra.mxu0 1.0
    %1106 = vmatprep.subr.mxu0 0.0
    %1107 = vmatpush1.msra.mxu0 1.0
    %1108 = vmatprep.subr.mxu0 0.0
    %1109 = vmatpush1.msra.mxu0 0.0
    %1110 = vmatprep.subr.mxu0 0.0
    %1111 = vmatpush1.msra.mxu0 0.0
    %1112 = vmatprep.subr.mxu0 0.0
    %1113 = vmatpush1.msra.mxu0 0.0
    %1114 = vmatprep.subr.mxu0 0.0
    %1115 = vmatpush1.msra.mxu0 0.0
    %1116 = vmatprep.subr.mxu0 0.0
    %1117 = vmatpush1.msra.mxu0 0.0
    %1118 = vmatprep.subr.mxu0 0.0
    %1119 = vmatpush1.msra.mxu0 0.0
    %1120 = vmatprep.subr.mxu0 0.0
    %1121 = vmatpush1.msra.mxu0 0.0
    %1122 = vmatprep.subr.mxu0 0.0
    %1123 = vmatpush1.msra.mxu0 0.0
    %1124 = vmatprep.subr.mxu0 0.0
    %1125 = vmatpush1.msra.mxu0 0.0
    %1126 = vmatprep.subr.mxu0 0.0
    %1127 = vmatpush1.msra.mxu0 0.0
    %1128 = vmatprep.subr.mxu0 0.0
    %1129 = vmatpush1.msra.mxu0 0.0
    %1130 = vmatprep.subr.mxu0 0.0
    %1131 = vmatpush1.msra.mxu0 0.0
    %1132 = vmatprep.subr.mxu0 0.0
    %1133 = vmatpush1.msra.mxu0 0.0
    %1134 = vmatprep.subr.mxu0 0.0
    %1135 = vmatpush1.msra.mxu0 0.0
    %1136 = vmatprep.subr.mxu0 0.0
    %1137 = vmatpush1.msra.mxu0 0.0
    %1138 = vmatprep.subr.mxu0 0.0
    %1139 = vmatpush1.msra.mxu0 0.0
    %1140 = vmatprep.subr.mxu0 0.0
    %1141 = vmatpush1.msra.mxu0 0.0
    %1142 = vmatprep.subr.mxu0 0.0
    %1143 = vmatpush1.msra.mxu0 0.0
    %1144 = vmatprep.subr.mxu0 0.0
    %1145 = vmatpush1.msra.mxu0 0.0
    %1146 = vmatprep.subr.mxu0 0.0
    %1147 = vmatpush1.msra.mxu0 0.0
    %1148 = vmatprep.subr.mxu0 0.0
    %1149 = vmatpush1.msra.mxu0 0.0
    %1150 = vmatprep.subr.mxu0 0.0
    %1151 = vmatpush1.msra.mxu0 0.0
    %1152 = vmatprep.subr.mxu0 0.0
    %1153 = vmatpush1.msra.mxu0 0.0
    %1154 = vmatprep.subr.mxu0 0.0
    %1155 = vmatpush1.msra.mxu0 0.0
    %1156 = vmatprep.subr.mxu0 0.0
    %1157 = vmatpush1.msra.mxu0 0.0
    %1158 = vmatprep.subr.mxu0 0.0
    %1159 = vmatpush1.msra.mxu0 0.0
    %1160 = vmatprep.subr.mxu0 0.0
    %1161 = vmatpush1.msra.mxu0 0.0
    %1162 = vmatprep.subr.mxu0 0.0
    %1163 = vmatpush1.msra.mxu0 0.0
    %1164 = vmatprep.mubr.f32.mxu0 0.0
    %v1165 = vand.u32 %v656, 4294901760
    %1166 = vmatmul.mubr.f32.gmra.mrb[0].mxu0 %v1165
    %v1167 = vpop.f32.mrb[0].mxu0
    %v1168 = vadd.f32 %v1085, %v1167
    %v1169 = vpop.f32.mrb[0].mxu0
    %1170 = vmatprep.mubr.f32.mxu0 0.0
    %v1171 = vand.u32 %v659, 4294901760
    %1172 = vmatmul.mubr.f32.gmra.mrb[0].mxu0 %v1171
    %v1173 = vpop.f32.mrb[0].mxu0
    %v1174 = vadd.f32 %v1091, %v1173
    %v1175 = vpop.f32.mrb[0].mxu0
    %1176 = vmatprep.mubr.f32.mxu0 0.0
    %v1177 = vand.u32 %v662, 4294901760
    %1178 = vmatmul.mubr.f32.gmra.mrb[0].mxu0 %v1177
    %v1179 = vpop.f32.mrb[0].mxu0
    %v1180 = vadd.f32 %v1097, %v1179
    %v1181 = vpop.f32.mrb[0].mxu0
    %1182 = vdwg.mxu0
    %v1183 = vrcp.pop %v640
    %v1184 = vmul.f32 %v1168, %v1183
    %v1185 = vrcp.pop %v646
    %v1186 = vmul.f32 %v1174, %v1185
    %v1187 = vrcp.pop %v652
    %v1188 = vmul.f32 %v1180, %v1187
    %v1189 = vmax.f32 %v1184, 1e-07
    %v1190 = vmax.f32 %v1186, 1e-07
    %v1191 = vmax.f32 %v1188, 1e-07
    %v1192 = vmin.f32 %v1189, 0.9999999
    %v1193 = vmin.f32 %v1190, 0.9999999
    %v1194 = vmin.f32 %v1191, 0.9999999
    %v1195 = vlog2.pop %v1192
    %v1196 = vmul.f32 %v1195, 0.6931472
    %v1197 = vlog2.pop %v1193
    %v1198 = vmul.f32 %v1197, 0.6931472
    %v1199 = vlog2.pop %v1194
    %v1200 = vmul.f32 %v1199, 0.6931472
    %v1201 = vsub.f32 0.0, %v1196
    %v1202 = vsub.f32 0.0, %v1198
    %v1203 = vsub.f32 0.0, %v1200
    %v1204 = vld [vmem:[#allocation2] sm:$0xff]
    %v1205 = vld [vmem:[#allocation2 + $0x8] sm:$0xff]
    %v1206 = vld [vmem:[#allocation2 + $0x10] sm:$0xff]
    %v1207 = vsel %vm67, %v1201, 0.0
    %v1208 = vsel %vm68, %v1202, 0.0
    %v1209 = vsel %vm69, %v1203, 0.0
    %v1210 = vadd.f32 %v1204, %v1207
    %v1211 = vadd.f32 %v1205, %v1208
    %v1212 = vadd.f32 %v1206, %v1209
    %vm1213 = vcmask 7168
    %1214 = vst.msk [vmem:[#allocation2] sm:$0xff] %vm1213, %v1210
    %1215 = vst.msk [vmem:[#allocation2 + $0x8] sm:$0xff] %vm1213, %v1211
    %1216 = vst.msk [vmem:[#allocation2 + $0x10] sm:$0xff] %vm1213, %v1212
    // Predicated region
    $region14: #{tpu_custom_call.1} parent=1 // pred_check
      %p1217 = pneg %p56
    $region15: #{tpu_custom_call.1} parent=1 // pred_check_branch
      %1219 = sbr.rel (%p1217) target = $region17
    $region16: #{tpu_custom_call.1} parent=1 // pred_region
      %v1220 = vld [vmem:[#allocation2] sm:$0xff]
      %v1221 = vld [vmem:[#allocation2 + $0x8] sm:$0xff]
      %v1222 = vld [vmem:[#allocation2 + $0x10] sm:$0xff]
      %v1223 = vsel %vm1213, %v1220, 0.0
      %v1224 = vsel %vm1213, %v1221, 0.0
      %v1225 = vadd.f32 %v1223, %v1224
      %v1226 = vsel %vm1213, %v1222, 0.0
      %v1227 = vadd.f32 %v1225, %v1226
      %1228 = vadd.xlane.f32.xlu0 %v1227
      %v1229 = vpop.xlane.xlu0 %1228
      %v1230 = vrot.slane %v1229, 4
      %v1231 = vadd.f32 %v1229, %v1230
      %v1232 = vrot.slane %v1231, 2
      %v1233 = vadd.f32 %v1231, %v1232
      %v1234 = vrot.slane %v1233, 1
      %v1235 = vadd.f32 %v1233, %v1234
      %s1236 = vtos %v1235
      %v1237 = vstv %s1236
      %1238 = vst [vmem:[#allocation3] sm:$0xff] %v1237
    $region17: #{tpu_custom_call.1} parent=1 // pred_fallthru
      _
    // Predicated region
    $region18: #{tpu_custom_call.1} parent=1 // pred_check
      _
    $region19: #{tpu_custom_call.1} parent=1 // pred_check_branch
      %1240 = sbr.rel (0) target = $region21
    $region20: #{tpu_custom_call.1} parent=1 // pred_region
      %s1242 = ssub.s32 128, 128
      %1243 = vsyncadd [#allocation4], %s1242
      %s1245 = sshll.u32 [#allocation3], 4
      %s1246 = int_to_ptr.vmem [resolvable:$true] %s1245
      %1248 = dma.vmem_to_hbm [thread:$0]  %s1246, 128, %s2, [#allocation4]
    $region21: #{tpu_custom_call.1} parent=1 // pred_fallthru
      _
    // Predicated region
    $region22: #{tpu_custom_call.1} parent=1 // pred_check
      _
    $region23: #{tpu_custom_call.1} parent=1 // pred_check_branch
      %1250 = sbr.rel (0) target = $region25
    $region24: #{tpu_custom_call.1} parent=1 // pred_region
      %1251 = dma.done [#allocation4], 128
    $region25: #{tpu_custom_call.1} parent=1 // pred_fallthru
      _
    %1252 = vsyncpa [#allocation4], 1

</llo_original>
